<compile_context>
chip_gen: v5e
topology: v5e:2x2
jax: 0.10.0
libtpu: 0.0.40
codegen_flags: <defaults>
</compile_context>

<pallas_src>
import functools

import jax
import jax.numpy as jnp
from jax.experimental import pallas as pl
from jax.experimental.pallas import tpu as pltpu


_LANE = 128


def _round_up(n, m):
    return ((n + m - 1) // m) * m


def _vmem_limit_bytes():
    """Per-generation scoped VMEM limit (safe fallback everywhere)."""
    try:
        cap = int(pltpu.get_tpu_info().vmem_capacity_bytes)
    except Exception:
        return 32 * 1024 * 1024          # v7x-safe (64 MiB physical)
    return int(min(96 * 1024 * 1024, cap // 2))   # v7x -> 32 MiB, v5e/v6e -> 64 MiB


def _block_budget_bytes(vmem_limit):
    # One f32 block appears ~12x in VMEM at peak: 2x double-buffered input +
    # 2x double-buffered output + ~6 live f32 temporaries in the body
    # (x, four rolled operands, v/h/result overlap).  Keep one f32 block at
    # ~1/12 of the scoped limit, clamped to the 1-8 MiB sweet spot.
    return max(1 * 1024 * 1024, min(8 * 1024 * 1024, vmem_limit // 12))


def _roll(x, shift, size, axis):
    """pltpu.roll with a statically normalized, strictly positive shift."""
    shift = int(shift) % int(size)
    if shift == 0:
        return x
    return pltpu.roll(x, shift, axis=axis)


# --------------------------------------------------------------------------
# Flattened (NC, H*W) path: lane-dense layout for small planes (W < 128).
# --------------------------------------------------------------------------
def _grad_kernel_flat(x_ref, m_ref, o_ref, *, W, HWp):
    # x_ref/o_ref: (TB, HWp) blocks; m_ref: (4, HWp) hoisted border masks.
    x = x_ref[...].astype(jnp.float32)
    m = m_ref[...]
    # roll(+s)[k] == x[k - s]; only positive shifts (negative shifts illegal).
    x_dn = _roll(x, HWp - W, HWp, 1) * m[0:1]   # x[row+1, col]; 0 on last row
    x_up = _roll(x, W,       HWp, 1) * m[1:2]   # x[row-1, col]; 0 on first row
    x_rt = _roll(x, HWp - 1, HWp, 1) * m[2:3]   # x[row, col+1]; 0 on last col
    x_lf = _roll(x, 1,       HWp, 1) * m[3:4]   # x[row, col-1]; 0 on first col
    v = x_dn - x_up
    h = x_rt - x_lf
    o_ref[...] = jnp.sqrt(v * v + h * h + 1e-6).astype(o_ref.dtype)


def _flat_block_planes(nc, hwp, block_budget):
    """Planes per block for the flattened layout.

    Always a multiple of 8 or the full plane count (block-shape legality on
    the sublane dim); keeps >= ~4 grid steps when NC >= 16 so the "parallel"
    axis can shard across v7x's two TensorCores.
    """
    plane_bytes = hwp * 4                       # compute is f32
    cap = max(1, block_budget // plane_bytes)
    if cap >= nc:
        if nc >= 16:
            return max(8, ((nc // 4) // 8) * 8)
        return nc                               # block dim == full dim: legal
    return max(8, (cap // 8) * 8)


def _get_gradient_flat(x, nc, H, W, vmem_limit, block_budget):
    hw = H * W
    hwp = _round_up(hw, _LANE)
    x2 = x.reshape(nc, hw)
    if hwp != hw:
        x2 = jnp.pad(x2, ((0, 0), (0, hwp - hw)))

    # Border masks, hoisted out of the hot body.  Their block index is
    # constant across the grid, so they are DMA'd into VMEM only once.
    k = jnp.arange(hwp, dtype=jnp.int32)
    row, col = k // W, k % W
    masks = jnp.stack(
        [row < H - 1, row > 0, col < W - 1, col > 0]).astype(jnp.float32)

    tb = _flat_block_planes(nc, hwp, block_budget)
    grid = (pl.cdiv(nc, tb),)
    kernel = functools.partial(_grad_kernel_flat, W=W, HWp=hwp)

    out2 = pl.pallas_call(
        kernel,
        out_shape=jax.ShapeDtypeStruct((nc, hwp), x.dtype),
        grid_spec=pltpu.PrefetchScalarGridSpec(
            num_scalar_prefetch=0,
            grid=grid,
            in_specs=[
                pl.BlockSpec((tb, hwp), lambda i: (i, 0)),
                pl.BlockSpec((4, hwp), lambda i: (0, 0)),
            ],
            out_specs=pl.BlockSpec((tb, hwp), lambda i: (i, 0)),
        ),
        compiler_params=pltpu.CompilerParams(
            dimension_semantics=("parallel",),
            vmem_limit_bytes=vmem_limit,
        ),
    )(x2, masks)

    if hwp != hw:
        out2 = out2[:, :hw]
    return out2.reshape(x.shape)


# --------------------------------------------------------------------------
# Natural (NC, H, W_pad) 3-D path: W >= 128 or planes too big for the flat
# budget.  Vertical neighbours are sublane rolls, horizontal are lane rolls.
# --------------------------------------------------------------------------
def _grad_kernel_3d(x_ref, o_ref, *, H, W):
    x = x_ref[...].astype(jnp.float32)          # (TB, H, Wp)
    _, Hb, Wp = x.shape
    row = jax.lax.broadcasted_iota(jnp.int32, x.shape, 1)
    col = jax.lax.broadcasted_iota(jnp.int32, x.shape, 2)
    zero = jnp.float32(0.0)
    x_dn = jnp.where(row < H - 1, _roll(x, Hb - 1, Hb, 1), zero)   # x[i+1, j]
    x_up = jnp.where(row > 0,     _roll(x, 1,      Hb, 1), zero)   # x[i-1, j]
    x_rt = jnp.where(col < W - 1, _roll(x, Wp - 1, Wp, 2), zero)   # x[i, j+1]
    x_lf = jnp.where(col > 0,     _roll(x, 1,      Wp, 2), zero)   # x[i, j-1]
    v = x_dn - x_up
    h = x_rt - x_lf
    o_ref[...] = jnp.sqrt(v * v + h * h + 1e-6).astype(o_ref.dtype)


def _planes_per_block_3d(nc, h, wp, block_budget):
    plane_bytes = h * wp * 4
    cap = max(1, block_budget // plane_bytes)
    tb = max(1, min(cap, nc))
    if nc >= 2:
        tb = min(tb, max(1, pl.cdiv(nc, 2)))    # >= 2 grid steps (megacore)
    return tb


def _get_gradient_3d(x, nc, H, W, vmem_limit, block_budget):
    wp = _round_up(W, _LANE)
    x3 = x.reshape(nc, H, W)
    if wp != W:
        x3 = jnp.pad(x3, ((0, 0), (0, 0), (0, wp - W)))

    tb = _planes_per_block_3d(nc, H, wp, block_budget)
    grid = (pl.cdiv(nc, tb),)
    kernel = functools.partial(_grad_kernel_3d, H=H, W=W)
    # TODO(synk): halo-tile rows ((tb, TH+2, wp) input blocks) for single
    # planes that do not fit one VMEM block; currently blocks hold full planes.

    out3 = pl.pallas_call(
        kernel,
        out_shape=jax.ShapeDtypeStruct((nc, H, wp), x.dtype),
        grid_spec=pltpu.PrefetchScalarGridSpec(
            num_scalar_prefetch=0,
            grid=grid,
            in_specs=[pl.BlockSpec((tb, H, wp), lambda i: (i, 0, 0))],
            out_specs=pl.BlockSpec((tb, H, wp), lambda i: (i, 0, 0)),
        ),
        compiler_params=pltpu.CompilerParams(
            dimension_semantics=("parallel",),
            vmem_limit_bytes=vmem_limit,
        ),
    )(x3)

    if wp != W:
        out3 = out3[:, :, :W]
    return out3.reshape(x.shape)


# --------------------------------------------------------------------------
# Public entry point.
# --------------------------------------------------------------------------
def get_gradient(x):
    """x: (N, C, H, W) float -> (N, C, H, W) float (same dtype)."""
    N, C, H, W = x.shape
    nc = N * C
    vmem_limit = _vmem_limit_bytes()
    block_budget = _block_budget_bytes(vmem_limit)

    hwp = _round_up(H * W, _LANE)
    flat_ok = (W < _LANE) and (hwp * 4 * min(8, nc) <= block_budget)
    if flat_ok:
        return _get_gradient_flat(x, nc, H, W, vmem_limit, block_budget)
    return _get_gradient_3d(x, nc, H, W, vmem_limit, block_budget)


def _reference(x):
    # Pure-JAX reference of the PyTorch forward (zero-padded 3x3 stencils).
    xp = jnp.pad(x, ((0, 0), (0, 0), (1, 1), (1, 1)))
    v = xp[:, :, 2:, 1:-1] - xp[:, :, :-2, 1:-1]
    h = xp[:, :, 1:-1, 2:] - xp[:, :, 1:-1, :-2]
    return jnp.sqrt(v * v + h * h + 1e-6)


if __name__ == "__main__":
    key = jax.random.PRNGKey(0)
    x = jax.random.normal(key, (2, 4, 16, 16), dtype=jnp.float32)

    out = jax.block_until_ready(get_gradient(x))

    ref = _reference(x)
    assert out.shape == (2, 4, 16, 16)
    assert jnp.allclose(out, ref, atol=1e-5, rtol=1e-5), (
        float(jnp.max(jnp.abs(out - ref))))

    print("KERNEL_OK")
</pallas_src>

<mosaic_0001>
module attributes {stable_mosaic.version = 11 : i64} {
  func.func @_grad_kernel_flat(%arg0: i32, %arg1: memref<8x256xf32, #tpu.memory_space<vmem>>, %arg2: memref<4x256xf32, #tpu.memory_space<vmem>>, %arg3: memref<8x256xf32, #tpu.memory_space<vmem>>) attributes {dimension_semantics = [#tpu.dimension_semantics<parallel>], iteration_bounds = array<i64: 1>, scalar_prefetch = 0 : i64, scratch_operands = 0 : i64, tpu.core_type = #tpu.core_type<tc>, window_params = [{transform_indices = @transform_0, window_bounds = array<i64: 8, 256>}, {pipeline_mode = #tpu.pipeline_mode<synchronous>, transform_indices = @transform_1, window_bounds = array<i64: 4, 256>}, {transform_indices = @transform_2, window_bounds = array<i64: 8, 256>}]} {
    %c0 = arith.constant 0 : index
    %c0_0 = arith.constant 0 : index
    %0 = vector.load %arg1[%c0, %c0_0] : memref<8x256xf32, #tpu.memory_space<vmem>>, vector<8x256xf32>
    %c0_1 = arith.constant 0 : index
    %c0_2 = arith.constant 0 : index
    %1 = vector.load %arg2[%c0_1, %c0_2] : memref<4x256xf32, #tpu.memory_space<vmem>>, vector<4x256xf32>
    %c240_i32 = arith.constant 240 : i32
    %2 = tpu.dynamic_rotate %0 by %c240_i32 dim 1 : vector<8x256xf32>, i32 -> vector<8x256xf32>
    %3 = vector.extract_strided_slice %1 {offsets = [0, 0], sizes = [1, 256], strides = [1, 1]} : vector<4x256xf32> to vector<1x256xf32>
    %4 = vector.broadcast %3 : vector<1x256xf32> to vector<8x256xf32>
    %5 = arith.mulf %2, %4 : vector<8x256xf32>
    %c16_i32 = arith.constant 16 : i32
    %6 = tpu.dynamic_rotate %0 by %c16_i32 dim 1 : vector<8x256xf32>, i32 -> vector<8x256xf32>
    %7 = vector.extract_strided_slice %1 {offsets = [1, 0], sizes = [1, 256], strides = [1, 1]} : vector<4x256xf32> to vector<1x256xf32>
    %8 = vector.broadcast %7 : vector<1x256xf32> to vector<8x256xf32>
    %9 = arith.mulf %6, %8 : vector<8x256xf32>
    %c255_i32 = arith.constant 255 : i32
    %10 = tpu.dynamic_rotate %0 by %c255_i32 dim 1 : vector<8x256xf32>, i32 -> vector<8x256xf32>
    %11 = vector.extract_strided_slice %1 {offsets = [2, 0], sizes = [1, 256], strides = [1, 1]} : vector<4x256xf32> to vector<1x256xf32>
    %12 = vector.broadcast %11 : vector<1x256xf32> to vector<8x256xf32>
    %13 = arith.mulf %10, %12 : vector<8x256xf32>
    %c1_i32 = arith.constant 1 : i32
    %14 = tpu.dynamic_rotate %0 by %c1_i32 dim 1 : vector<8x256xf32>, i32 -> vector<8x256xf32>
    %15 = vector.extract_strided_slice %1 {offsets = [3, 0], sizes = [1, 256], strides = [1, 1]} : vector<4x256xf32> to vector<1x256xf32>
    %16 = vector.broadcast %15 : vector<1x256xf32> to vector<8x256xf32>
    %17 = arith.mulf %14, %16 : vector<8x256xf32>
    %18 = arith.subf %5, %9 : vector<8x256xf32>
    %19 = arith.subf %13, %17 : vector<8x256xf32>
    %20 = arith.mulf %18, %18 : vector<8x256xf32>
    %21 = arith.mulf %19, %19 : vector<8x256xf32>
    %22 = arith.addf %20, %21 : vector<8x256xf32>
    %cst = arith.constant 9.99999997E-7 : f32
    %23 = vector.broadcast %cst : f32 to vector<8x256xf32>
    %24 = arith.addf %22, %23 : vector<8x256xf32>
    %25 = math.sqrt %24 : vector<8x256xf32>
    %c0_3 = arith.constant 0 : index
    %c0_4 = arith.constant 0 : index
    %26 = vector.load %arg3[%c0_3, %c0_4] : memref<8x256xf32, #tpu.memory_space<vmem>>, vector<8x256xf32>
    tpu.vector_store %arg3[%c0_3, %c0_4], %25 {strides = array<i32>} : memref<8x256xf32, #tpu.memory_space<vmem>>, vector<8x256xf32>,
    return
  }
  func.func @transform_0(%arg0: i32) -> (i32, i32) {
    %c0_i32 = arith.constant 0 : i32
    %c0_i32_0 = arith.constant 0 : i32
    return %arg0, %c0_i32 : i32, i32
  }
  func.func @transform_1(%arg0: i32) -> (i32, i32) {
    %c0_i32 = arith.constant 0 : i32
    %c0_i32_0 = arith.constant 0 : i32
    %c0_i32_1 = arith.constant 0 : i32
    return %c0_i32, %c0_i32_0 : i32, i32
  }
  func.func @transform_2(%arg0: i32) -> (i32, i32) {
    %c0_i32 = arith.constant 0 : i32
    %c0_i32_0 = arith.constant 0 : i32
    return %arg0, %c0_i32 : i32, i32
  }
}

</mosaic_0001>

<llo_original>
// kernel: tpu_custom_call.1
$region0: #{tpu_custom_call.1}
  #allocation0 [shape = 'u32[]', space=smem, size = 0x4, offset = 0x4, fixed_abs, tag = 'smem constant byte address 0x4 - core index']
  #allocation1 [shape = 'u32[72,128]{1,0:T(1,128)}', space=vmem, size = 0x9000, scoped, tag = 'internal scratch']
  %s0 = inlined_call_operand.hbm [shape: f32[8,256], index: 0, kind: input, shape index: {}]
  %s1 = inlined_call_operand.hbm [shape: f32[4,256], index: 1, kind: input, shape index: {}]
  %s2 = inlined_call_operand.hbm [shape: f32[8,256], index: 2, kind: output, shape index: {}]
  %s3 = sld [smem:[#allocation0]]
  $region26: #{tpu_custom_call.1} parent=0
    _
  %s5 = ssub.s32 1, %s3
  %s6 = scalar_select 0, %s5, %s3
  $region1: #{tpu_custom_call.1} parent=0
    #allocation2 [shape = 'u8[8192]{0}', space=vmem, size = 0x2000, scoped, tag = 'input window, operand 0, single buffered']
    #allocation3 [shape = 's32[1]{0}', space=sflag, size = 0x4, scoped, tag = 'scoped memory for tpu_custom_call.1']
    #allocation4 [shape = 's32[1]{0}', space=sflag, size = 0x4, scoped, tag = 'scoped memory for tpu_custom_call.1']
    #allocation5 [shape = 'u8[4096]{0}', space=vmem, size = 0x1000, scoped, tag = 'input window, operand 1, single buffered']
    #allocation6 [shape = 's32[1]{0}', space=sflag, size = 0x4, scoped, tag = 'scoped memory for tpu_custom_call.1']
    #allocation7 [shape = 'u8[8192]{0}', space=vmem, size = 0x2000, scoped, tag = 'output window, operand 0, single buffered']
    %7 = vsyncpa [#allocation3], 0
    %8 = vsyncpa [#allocation6], 0
    %9 = vsyncpa [#allocation4], 0
    // Predicated region
    $region2: #{tpu_custom_call.1} parent=1 // pred_check
      _
    $region3: #{tpu_custom_call.1} parent=1 // pred_check_branch
      %11 = sbr.rel (0) target = $region5
    $region4: #{tpu_custom_call.1} parent=1 // pred_region
      %13 = vsyncadd [#allocation3], 0
      %s15 = sshll.u32 %s0, 4
      %s16 = int_to_ptr.hbm [resolvable:$true] %s15
      %s17 = sshll.u32 [#allocation2], 4
      %s18 = int_to_ptr.vmem [resolvable:$true] %s17
      %20 = dma.hbm_to_vmem [thread:$0]  %s16, 256, %s18, [#allocation3]
    $region5: #{tpu_custom_call.1} parent=1 // pred_fallthru
      _
    // Predicated region
    $region6: #{tpu_custom_call.1} parent=1 // pred_check
      _
    $region7: #{tpu_custom_call.1} parent=1 // pred_check_branch
      %22 = sbr.rel (0) target = $region9
    $region8: #{tpu_custom_call.1} parent=1 // pred_region
      %24 = vsyncadd [#allocation6], 0
      %s26 = sshll.u32 %s1, 4
      %s27 = int_to_ptr.hbm [resolvable:$true] %s26
      %s28 = sshll.u32 [#allocation5], 4
      %s29 = int_to_ptr.vmem [resolvable:$true] %s28
      %31 = dma.hbm_to_vmem [thread:$0]  %s27, 128, %s29, [#allocation6]
    $region9: #{tpu_custom_call.1} parent=1 // pred_fallthru
      _
    // Predicated region
    $region10: #{tpu_custom_call.1} parent=1 // pred_check
      _
    $region11: #{tpu_custom_call.1} parent=1 // pred_check_branch
      %33 = sbr.rel (0) target = $region13
    $region12: #{tpu_custom_call.1} parent=1 // pred_region
      %35 = dma.done [#allocation3], 256
    $region13: #{tpu_custom_call.1} parent=1 // pred_fallthru
      _
    // Predicated region
    $region14: #{tpu_custom_call.1} parent=1 // pred_check
      _
    $region15: #{tpu_custom_call.1} parent=1 // pred_check_branch
      %37 = sbr.rel (0) target = $region17
    $region16: #{tpu_custom_call.1} parent=1 // pred_region
      %39 = dma.done [#allocation6], 128
    $region17: #{tpu_custom_call.1} parent=1 // pred_fallthru
      _
    %v40 = vld [vmem:[#allocation2] sm:$0xff]
    %v41 = vld [vmem:[#allocation2 + $0x8] sm:$0xff]
    %v42 = vld [vmem:[#allocation5] sm:$0xff]
    %43 = vrot.lane.b32.xlu0 %v40, 112
    %v44 = vpop.permute.xlu0 %43
    %45 = vrot.lane.b32.xlu0 %v41, 112
    %v46 = vpop.permute.xlu0 %45
    %v47 = vlaneseq
    %v48 = vand.u32 %v47, 127
    %vm49 = vcmp.lt.s32.totalorder %v48, 112
    %v50 = vsel %vm49, %v44, %v46
    %v51 = vsel %vm49, %v46, %v44
    %v53 = vperm.slane %v42, 0
    %v54 = vperm.slane %v42, 4
    %v57 = vperm.slane %v53, 0
    %v58 = vperm.slane %v54, 0
    %v59 = vmul.f32 %v50, %v57
    %v60 = vmul.f32 %v51, %v58
    %61 = vrot.lane.b32.xlu0 %v40, 16
    %v62 = vpop.permute.xlu0 %61
    %63 = vrot.lane.b32.xlu0 %v41, 16
    %v64 = vpop.permute.xlu0 %63
    %vm65 = vcmp.lt.s32.totalorder %v48, 16
    %v66 = vsel %vm65, %v62, %v64
    %v67 = vsel %vm65, %v64, %v62
    %v68 = vperm.slane %v42, 1
    %v69 = vperm.slane %v42, 5
    %v72 = vperm.slane %v68, 1
    %v73 = vperm.slane %v69, 1
    %v74 = vmul.f32 %v67, %v72
    %v75 = vmul.f32 %v66, %v73
    %76 = vrot.lane.b32.xlu0 %v40, 127
    %v77 = vpop.permute.xlu0 %76
    %78 = vrot.lane.b32.xlu0 %v41, 127
    %v79 = vpop.permute.xlu0 %78
    %vm80 = vcmp.lt.s32.totalorder %v48, 127
    %v81 = vsel %vm80, %v77, %v79
    %v82 = vsel %vm80, %v79, %v77
    %v83 = vperm.slane %v42, 2
    %v84 = vperm.slane %v42, 6
    %v87 = vperm.slane %v83, 2
    %v88 = vperm.slane %v84, 2
    %v89 = vmul.f32 %v81, %v87
    %v90 = vmul.f32 %v82, %v88
    %91 = vrot.lane.b32.xlu0 %v40, 1
    %v92 = vpop.permute.xlu0 %91
    %93 = vrot.lane.b32.xlu0 %v41, 1
    %v94 = vpop.permute.xlu0 %93
    %vm95 = vcmp.lt.s32.totalorder %v48, 1
    %v96 = vsel %vm95, %v92, %v94
    %v97 = vsel %vm95, %v94, %v92
    %v98 = vperm.slane %v42, 3
    %v99 = vperm.slane %v42, 7
    %v102 = vperm.slane %v98, 3
    %v103 = vperm.slane %v99, 3
    %v104 = vmul.f32 %v97, %v102
    %v105 = vmul.f32 %v96, %v103
    %v106 = vsub.f32 %v59, %v74
    %v107 = vsub.f32 %v60, %v75
    %v108 = vsub.f32 %v89, %v104
    %v109 = vsub.f32 %v90, %v105
    %v110 = vmul.f32 %v106, %v106
    %v111 = vmul.f32 %v107, %v107
    %v112 = vmul.f32 %v108, %v108
    %v113 = vmul.f32 %v109, %v109
    %v114 = vadd.f32 %v110, %v112
    %v115 = vadd.f32 %v111, %v113
    %v116 = vadd.f32 %v114, 1e-06
    %v117 = vadd.f32 %v115, 1e-06
    %v118 = vrsqrt.pop %v116
    %v119 = vmul.f32 %v118, %v116
    %v120 = vmul.f32 %v119, %v118
    %v121 = vmul.f32 0.5, %v120
    %v122 = vsub.f32 1.5, %v121
    %v123 = vmul.f32 %v118, %v122
    %v124 = vmul.f32 %v116, %v123
    %vm125 = vcmp.eq.f32.partialorder %v116, inf
    %v126 = vsel %vm125, %v116, %v124
    %vm127 = vcmp.eq.f32.partialorder %v116, 0.0
    %v128 = vand.u32 %v116, 2147483648
    %v129 = vsel %vm127, %v128, %v126
    %v130 = vrsqrt.pop %v117
    %v131 = vmul.f32 %v130, %v117
    %v132 = vmul.f32 %v131, %v130
    %v133 = vmul.f32 0.5, %v132
    %v134 = vsub.f32 1.5, %v133
    %v135 = vmul.f32 %v130, %v134
    %v136 = vmul.f32 %v117, %v135
    %vm137 = vcmp.eq.f32.partialorder %v117, inf
    %v138 = vsel %vm137, %v117, %v136
    %vm139 = vcmp.eq.f32.partialorder %v117, 0.0
    %v140 = vand.u32 %v117, 2147483648
    %v141 = vsel %vm139, %v140, %v138
    %142 = vst [vmem:[#allocation7] sm:$0xff] %v129
    %143 = vst [vmem:[#allocation7 + $0x8] sm:$0xff] %v141
    // Predicated region
    $region18: #{tpu_custom_call.1} parent=1 // pred_check
      _
    $region19: #{tpu_custom_call.1} parent=1 // pred_check_branch
      %145 = sbr.rel (0) target = $region21
    $region20: #{tpu_custom_call.1} parent=1 // pred_region
      %147 = vsyncadd [#allocation4], 0
      %s149 = sshll.u32 [#allocation7], 4
      %s150 = int_to_ptr.vmem [resolvable:$true] %s149
      %s151 = sshll.u32 %s2, 4
      %s152 = int_to_ptr.hbm [resolvable:$true] %s151
      %154 = dma.vmem_to_hbm [thread:$0]  %s150, 256, %s152, [#allocation4]
    $region21: #{tpu_custom_call.1} parent=1 // pred_fallthru
      _
    // Predicated region
    $region22: #{tpu_custom_call.1} parent=1 // pred_check
      _
    $region23: #{tpu_custom_call.1} parent=1 // pred_check_branch
      %156 = sbr.rel (0) target = $region25
    $region24: #{tpu_custom_call.1} parent=1 // pred_region
      %158 = dma.done [#allocation4], 256
    $region25: #{tpu_custom_call.1} parent=1 // pred_fallthru
      _
    %159 = vsyncpa [#allocation3], 1
    %160 = vsyncpa [#allocation6], 1
    %161 = vsyncpa [#allocation4], 1

</llo_original>
